<compile_context>
chip_gen: v5e
topology: v5e:2x2
jax: 0.10.0
libtpu: 0.0.40
codegen_flags: <defaults>
</compile_context>

<pallas_src>
import math

import jax
import jax.numpy as jnp
from jax.experimental import pallas as pl
from jax.experimental.pallas import tpu as pltpu

LANES = 128           # lane-dense last dim -> unmasked full-lane vector stores
MAX_ROW_TILE = 1024   # rows (sublane dim) per grid step; 512 KiB f32 tile


def _neural_ode_kernel(gamma_ref, y_ref, o_ref):
    # dy/dt = -y + sin(y + gamma)^2 on one (TM, 128) VMEM tile.
    y = y_ref[...]
    g = gamma_ref[0]                 # scalar broadcast from SMEM
    s = jnp.sin(y + g)               # transcendental -> EUP slot
    o_ref[...] = s * s - y           # == -y + sin(y + gamma)**2


def neural_ode_forward(t, y, gamma):
    """Pallas equivalent of neuralODE.forward(t, y) with self.gamma = gamma."""
    del t  # the reference forward never uses t
    orig_shape = y.shape
    orig_dtype = y.dtype

    flat = jnp.ravel(y).astype(jnp.float32)
    n = flat.shape[0]

    # Lane-dense (rows, 128) slab; pad rows to a multiple of the row tile so
    # every grid step sees a full (TM, 128) block (no partial/masked tiles).
    rows = max(1, math.ceil(n / LANES))
    tm = min(MAX_ROW_TILE, ((rows + 7) // 8) * 8)     # multiple of 8 sublanes
    rows_padded = math.ceil(rows / tm) * tm
    total = rows_padded * LANES
    flat = jnp.pad(flat, (0, total - n))
    y2 = flat.reshape(rows_padded, LANES)

    gamma_arr = jnp.asarray(gamma, dtype=jnp.float32).reshape(1)

    out = pl.pallas_call(
        _neural_ode_kernel,
        grid=(rows_padded // tm,),
        in_specs=[
            pl.BlockSpec(memory_space=pltpu.MemorySpace.SMEM),   # gamma scalar
            pl.BlockSpec((tm, LANES), lambda i: (i, 0)),         # y row tile
        ],
        out_specs=pl.BlockSpec((tm, LANES), lambda i: (i, 0)),
        out_shape=jax.ShapeDtypeStruct((rows_padded, LANES), jnp.float32),
        compiler_params=pltpu.CompilerParams(
            dimension_semantics=("parallel",),   # megacore sharding on v7x
        ),
    )(gamma_arr, y2)

    return out.reshape(-1)[:n].reshape(orig_shape).astype(orig_dtype)


if __name__ == "__main__":
    key = jax.random.PRNGKey(0)
    y = jax.random.normal(key, (2, 4, 16, 16), dtype=jnp.float32)  # ODE state
    t = jnp.float32(0.0)
    gamma = jnp.float32(0.5)

    fwd = jax.jit(neural_ode_forward)
    dydt = fwd(t, y, gamma)
    jax.block_until_ready(dydt)

    ref = -y + jnp.sin(y + gamma) ** 2
    assert dydt.shape == y.shape and dydt.dtype == y.dtype
    assert jnp.allclose(dydt, ref, atol=1e-5, rtol=1e-5)
    print("KERNEL_OK")
</pallas_src>

<mosaic_0001>
module attributes {stable_mosaic.version = 11 : i64} {
  func.func @_neural_ode_kernel(%arg0: i32, %arg1: memref<1xf32, #tpu.memory_space<smem>>, %arg2: memref<16x128xf32, #tpu.memory_space<vmem>>, %arg3: memref<16x128xf32, #tpu.memory_space<vmem>>) attributes {dimension_semantics = [#tpu.dimension_semantics<parallel>], iteration_bounds = array<i64: 1>, scalar_prefetch = 0 : i64, scratch_operands = 0 : i64, tpu.core_type = #tpu.core_type<tc>, window_params = [{transform_indices = @transform_0, window_bounds = array<i64: 1>}, {transform_indices = @transform_1, window_bounds = array<i64: 16, 128>}, {transform_indices = @transform_2, window_bounds = array<i64: 16, 128>}]} {
    %c0 = arith.constant 0 : index
    %c0_0 = arith.constant 0 : index
    %0 = vector.load %arg2[%c0, %c0_0] : memref<16x128xf32, #tpu.memory_space<vmem>>, vector<16x128xf32>
    %c0_1 = arith.constant 0 : index
    %1 = memref.load %arg1[%c0_1] : memref<1xf32, #tpu.memory_space<smem>>
    %2 = vector.broadcast %1 : f32 to vector<16x128xf32>
    %3 = arith.addf %0, %2 : vector<16x128xf32>
    %4 = math.sin %3 : vector<16x128xf32>
    %5 = arith.mulf %4, %4 : vector<16x128xf32>
    %6 = arith.subf %5, %0 : vector<16x128xf32>
    %c0_2 = arith.constant 0 : index
    %c0_3 = arith.constant 0 : index
    %7 = vector.load %arg3[%c0_2, %c0_3] : memref<16x128xf32, #tpu.memory_space<vmem>>, vector<16x128xf32>
    tpu.vector_store %arg3[%c0_2, %c0_3], %6 {strides = array<i32>} : memref<16x128xf32, #tpu.memory_space<vmem>>, vector<16x128xf32>,
    return
  }
  func.func @transform_0(%arg0: i32) -> i32 {
    %c0_i32 = arith.constant 0 : i32
    %c0_i32_0 = arith.constant 0 : i32
    return %c0_i32 : i32
  }
  func.func @transform_1(%arg0: i32) -> (i32, i32) {
    %c0_i32 = arith.constant 0 : i32
    %c0_i32_0 = arith.constant 0 : i32
    return %arg0, %c0_i32 : i32, i32
  }
  func.func @transform_2(%arg0: i32) -> (i32, i32) {
    %c0_i32 = arith.constant 0 : i32
    %c0_i32_0 = arith.constant 0 : i32
    return %arg0, %c0_i32 : i32, i32
  }
}

</mosaic_0001>

<llo_original>
// kernel: neural_ode_forward.1
$region0: #{neural_ode_forward.1}
  #allocation0 [shape = 'u32[]', space=smem, size = 0x4, offset = 0x4, fixed_abs, tag = 'smem constant byte address 0x4 - core index']
  #allocation1 [shape = 'u32[72,128]{1,0:T(1,128)}', space=vmem, size = 0x9000, scoped, tag = 'internal scratch']
  #allocation2 [shape = 'f32[1]{0:T(128)S(6)}', space=smem, size = 0x200, scoped, tag = 'scoped memory for neural_ode_forward.1']
  %s0 = inlined_call_operand.<no memory space> [shape: f32[1], index: 0, kind: input, shape index: {}]
  %s1 = inlined_call_operand.vmem [shape: f32[16,128], index: 1, kind: input, shape index: {}]
  %s2 = inlined_call_operand.vmem [shape: f32[16,128], index: 2, kind: output, shape index: {}]
  %s3 = sld [smem:[#allocation0]]
  $region18: #{neural_ode_forward.1} parent=0
    _
  %s5 = ssub.s32 1, %s3
  %s6 = scalar_select 0, %s5, %s3
  %7 = sst [smem:[#allocation2]] %s0
  // Predicated region
  $region2: #{neural_ode_forward.1} parent=0 // pred_check
    _
  $region3: #{neural_ode_forward.1} parent=0 // pred_check_branch
    %9 = sbr.rel (0) target = $region5
  $region4: #{neural_ode_forward.1} parent=0 // pred_region
    _
  $region5: #{neural_ode_forward.1} parent=0 // pred_fallthru
    _
  // Predicated region
  $region6: #{neural_ode_forward.1} parent=0 // pred_check
    _
  $region7: #{neural_ode_forward.1} parent=0 // pred_check_branch
    %11 = sbr.rel (0) target = $region9
  $region8: #{neural_ode_forward.1} parent=0 // pred_region
    _
  $region9: #{neural_ode_forward.1} parent=0 // pred_fallthru
    _
  %v12 = vld [vmem:[%s1] sm:$0xff]
  %v13 = vld [vmem:[%s1 + $0x8] sm:$0xff]
  %s14 = sld [smem:[#allocation2]]
  %v15 = vstv %s14
  %v16 = vadd.f32 %v12, %v15
  %v17 = vadd.f32 %v13, %v15
  %v18 = vand.u32 2147483647, %v16
  %vm19 = vcmp.le.f32.partialorder %v18, 0.7853982
  %vm20 = vcmp.lt.s32.totalorder %v16, 0
  %v21 = vand.u32 %v16, 2139095040
  %v22 = vshrl.u32 %v21, 23
  %v23 = vsub.s32 %v22, 127
  %v24 = vand.u32 2147483647, %v16
  %v25 = vand.u32 %v24, 8388607
  %v26 = vor.u32 %v25, 8388608
  %v27 = vsub.s32 0, %v26
  %v28 = vadd.s32 %v23, 1
  %vm29 = vcmp.gt.s32.totalorder %v28, 0
  %v30 = vsel %vm29, %v28, 0
  %v31 = vshrl.u32 %v30, 5
  %v32 = vand.u32 %v30, 31
  %v33 = vsub.s32 32, %v32
  %v34 = vshrl.u32 683565275, %v33
  %v35 = vshll.u32 683565275, %v32
  %v36 = vshrl.u32 2475754826, %v33
  %v37 = vor.u32 %v35, %v36
  %v38 = vshll.u32 2475754826, %v32
  %v39 = vshrl.u32 2131351028, %v33
  %v40 = vor.u32 %v38, %v39
  %v41 = vshll.u32 2131351028, %v32
  %v42 = vshrl.u32 2102212464, %v33
  %v43 = vor.u32 %v41, %v42
  %v44 = vshll.u32 2102212464, %v32
  %v45 = vshrl.u32 920167782, %v33
  %v46 = vor.u32 %v44, %v45
  %v47 = vshll.u32 920167782, %v32
  %v48 = vshrl.u32 1326507024, %v33
  %v49 = vor.u32 %v47, %v48
  %vm50 = vcmp.lt.s32.totalorder %v31, 1
  %vm51 = vcmp.lt.s32.totalorder %v31, 2
  %vm52 = vcmp.lt.s32.totalorder %v31, 3
  %vm53 = vcmp.lt.s32.totalorder %v31, 4
  %v54 = vsel %vm50, %v34, %v37
  %v55 = vsel %vm53, %v43, 2102212464
  %v56 = vsel %vm52, %v40, %v55
  %v57 = vsel %vm51, %v54, %v56
  %v58 = vsel %vm50, %v37, %v40
  %v59 = vsel %vm53, %v46, 920167782
  %v60 = vsel %vm52, %v43, %v59
  %v61 = vsel %vm51, %v58, %v60
  %v62 = vsel %vm50, %v40, %v43
  %v63 = vsel %vm53, %v49, 1326507024
  %v64 = vsel %vm52, %v46, %v63
  %v65 = vsel %vm51, %v62, %v64
  %v66 = vshll.u32 %v26, 8
  %v67 = vand.u32 %v66, 65535
  %v68 = vshrl.u32 %v66, 16
  %v69 = vand.u32 %v65, 65535
  %v70 = vshrl.u32 %v65, 16
  %v71 = vmul.u32 %v67, %v69
  %v72 = vmul.u32 %v67, %v70
  %v73 = vmul.u32 %v68, %v69
  %v74 = vmul.u32 %v68, %v70
  %v75 = vshll.u32 %v72, 16
  %v76 = vshrl.u32 %v72, 16
  %v77 = vshll.u32 %v73, 16
  %v78 = vshrl.u32 %v73, 16
  %vm79 = vc.u32 %v71, %v75
  %v80 = vsel %vm79, 1, 0
  %v81 = vadd.s32 %v71, %v75
  %v82 = vadd.s32 %v74, %v80
  %vm83 = vc.u32 %v81, %v77
  %v84 = vsel %vm83, 1, 0
  %v85 = vadd.s32 %v81, %v77
  %v86 = vadd.s32 %v82, %v84
  %v87 = vadd.s32 %v86, %v76
  %v88 = vadd.s32 %v87, %v78
  %v89 = vand.u32 %v66, 65535
  %v90 = vshrl.u32 %v66, 16
  %v91 = vand.u32 %v61, 65535
  %v92 = vshrl.u32 %v61, 16
  %v93 = vmul.u32 %v89, %v91
  %v94 = vmul.u32 %v89, %v92
  %v95 = vmul.u32 %v90, %v91
  %v96 = vmul.u32 %v90, %v92
  %v97 = vshll.u32 %v94, 16
  %v98 = vshrl.u32 %v94, 16
  %v99 = vshll.u32 %v95, 16
  %v100 = vshrl.u32 %v95, 16
  %vm101 = vc.u32 %v93, %v97
  %v102 = vsel %vm101, 1, 0
  %v103 = vadd.s32 %v93, %v97
  %v104 = vadd.s32 %v96, %v102
  %vm105 = vc.u32 %v103, %v99
  %v106 = vsel %vm105, 1, 0
  %v107 = vadd.s32 %v103, %v99
  %v108 = vadd.s32 %v104, %v106
  %v109 = vadd.s32 %v108, %v98
  %v110 = vadd.s32 %v109, %v100
  %v111 = vmul.u32 %v66, %v57
  %v112 = vadd.s32 %v88, %v107
  %vm113 = vc.u32 %v88, %v107
  %v114 = vadd.s32 %v110, 1
  %v115 = vsel %vm113, %v114, %v110
  %v116 = vadd.s32 %v111, %v115
  %v117 = vadd.s32 %v116, 536870912
  %v118 = vshrl.u32 %v117, 30
  %v119 = vshll.u32 %v118, 30
  %v120 = vsub.s32 %v116, %v119
  %vm121 = vcmp.lt.s32.totalorder %v120, 0
  %v122 = vsub.s32 0, %v120
  %v123 = vsel %vm121, %v122, %v120
  %v124 = vclz %v123
  %v125 = vsub.s32 %v124, 2
  %vm126 = vcmp.gt.s32.totalorder 0, %v125
  %v127 = vsel %vm126, 0, %v125
  %v128 = vsub.s32 32, %v127
  %v129 = vshll.u32 %v120, %v127
  %v130 = vshrl.u32 %v112, %v128
  %v131 = vor.u32 %v129, %v130
  %v132 = vsub.s32 4294967266, %v127
  %v133 = vadd.s32 %v132, 127
  %v134 = vshll.u32 %v133, 23
  %v135 = vor.u32 4788187, %v134
  %v136 = vand.u32 2147483647, %v135
  %v138 = vcvt.s32.f32 %v131
  %v139 = vmul.f32 %v138, %v136
  %v140 = vxor.u32 %v139, 2147483648
  %v141 = vsel %vm20, %v140, %v139
  %v142 = vsub.s32 4, %v118
  %v143 = vsel %vm20, %v142, %v118
  %v144 = vsel %vm19, %v16, %v141
  %v145 = vsel %vm19, 0, %v143
  %v146 = vmul.f32 %v144, %v144
  %v147 = vmul.f32 %v146, -0.001358992
  %v148 = vadd.f32 %v147, 0.041655596
  %v149 = vmul.f32 %v146, %v148
  %v150 = vadd.f32 %v149, -0.4999988
  %v151 = vmul.f32 %v146, %v150
  %v152 = vadd.f32 1.0, %v151
  %v153 = vmul.f32 %v144, %v144
  %v154 = vmul.f32 %v153, -0.00019511016
  %v155 = vadd.f32 %v154, 0.008332121
  %v156 = vmul.f32 %v153, %v155
  %v157 = vadd.f32 %v156, -0.16666654
  %v158 = vmul.f32 %v153, %v157
  %v159 = vadd.f32 %v158, 1.0
  %v160 = vmul.f32 %v159, %v144
  %vm161 = vweird.f32 %v16
  %v162 = vadd.s32 %v145, 3
  %v163 = vand.u32 %v162, 3
  %vm164 = vcmp.lt.s32.totalorder %v163, 2
  %vm165 = vcmp.eq.s32.totalorder %v163, 0
  %v166 = vxor.u32 %v160, 2147483648
  %v167 = vsel %vm165, %v152, %v166
  %vm168 = vcmp.eq.s32.totalorder %v163, 2
  %v169 = vxor.u32 %v152, 2147483648
  %v170 = vsel %vm168, %v169, %v160
  %v171 = vsel %vm164, %v167, %v170
  %v172 = vsel %vm161, nan, %v171
  %v173 = vand.u32 2147483647, %v17
  %vm174 = vcmp.le.f32.partialorder %v173, 0.7853982
  %vm175 = vcmp.lt.s32.totalorder %v17, 0
  %v176 = vand.u32 %v17, 2139095040
  %v177 = vshrl.u32 %v176, 23
  %v178 = vsub.s32 %v177, 127
  %v179 = vand.u32 2147483647, %v17
  %v180 = vand.u32 %v179, 8388607
  %v181 = vor.u32 %v180, 8388608
  %v182 = vsub.s32 0, %v181
  %v183 = vadd.s32 %v178, 1
  %vm184 = vcmp.gt.s32.totalorder %v183, 0
  %v185 = vsel %vm184, %v183, 0
  %v186 = vshrl.u32 %v185, 5
  %v187 = vand.u32 %v185, 31
  %v188 = vsub.s32 32, %v187
  %v189 = vshrl.u32 683565275, %v188
  %v190 = vshll.u32 683565275, %v187
  %v191 = vshrl.u32 2475754826, %v188
  %v192 = vor.u32 %v190, %v191
  %v193 = vshll.u32 2475754826, %v187
  %v194 = vshrl.u32 2131351028, %v188
  %v195 = vor.u32 %v193, %v194
  %v196 = vshll.u32 2131351028, %v187
  %v197 = vshrl.u32 2102212464, %v188
  %v198 = vor.u32 %v196, %v197
  %v199 = vshll.u32 2102212464, %v187
  %v200 = vshrl.u32 920167782, %v188
  %v201 = vor.u32 %v199, %v200
  %v202 = vshll.u32 920167782, %v187
  %v203 = vshrl.u32 1326507024, %v188
  %v204 = vor.u32 %v202, %v203
  %vm205 = vcmp.lt.s32.totalorder %v186, 1
  %vm206 = vcmp.lt.s32.totalorder %v186, 2
  %vm207 = vcmp.lt.s32.totalorder %v186, 3
  %vm208 = vcmp.lt.s32.totalorder %v186, 4
  %v209 = vsel %vm205, %v189, %v192
  %v210 = vsel %vm208, %v198, 2102212464
  %v211 = vsel %vm207, %v195, %v210
  %v212 = vsel %vm206, %v209, %v211
  %v213 = vsel %vm205, %v192, %v195
  %v214 = vsel %vm208, %v201, 920167782
  %v215 = vsel %vm207, %v198, %v214
  %v216 = vsel %vm206, %v213, %v215
  %v217 = vsel %vm205, %v195, %v198
  %v218 = vsel %vm208, %v204, 1326507024
  %v219 = vsel %vm207, %v201, %v218
  %v220 = vsel %vm206, %v217, %v219
  %v221 = vshll.u32 %v181, 8
  %v222 = vand.u32 %v221, 65535
  %v223 = vshrl.u32 %v221, 16
  %v224 = vand.u32 %v220, 65535
  %v225 = vshrl.u32 %v220, 16
  %v226 = vmul.u32 %v222, %v224
  %v227 = vmul.u32 %v222, %v225
  %v228 = vmul.u32 %v223, %v224
  %v229 = vmul.u32 %v223, %v225
  %v230 = vshll.u32 %v227, 16
  %v231 = vshrl.u32 %v227, 16
  %v232 = vshll.u32 %v228, 16
  %v233 = vshrl.u32 %v228, 16
  %vm234 = vc.u32 %v226, %v230
  %v235 = vsel %vm234, 1, 0
  %v236 = vadd.s32 %v226, %v230
  %v237 = vadd.s32 %v229, %v235
  %vm238 = vc.u32 %v236, %v232
  %v239 = vsel %vm238, 1, 0
  %v240 = vadd.s32 %v236, %v232
  %v241 = vadd.s32 %v237, %v239
  %v242 = vadd.s32 %v241, %v231
  %v243 = vadd.s32 %v242, %v233
  %v244 = vand.u32 %v221, 65535
  %v245 = vshrl.u32 %v221, 16
  %v246 = vand.u32 %v216, 65535
  %v247 = vshrl.u32 %v216, 16
  %v248 = vmul.u32 %v244, %v246
  %v249 = vmul.u32 %v244, %v247
  %v250 = vmul.u32 %v245, %v246
  %v251 = vmul.u32 %v245, %v247
  %v252 = vshll.u32 %v249, 16
  %v253 = vshrl.u32 %v249, 16
  %v254 = vshll.u32 %v250, 16
  %v255 = vshrl.u32 %v250, 16
  %vm256 = vc.u32 %v248, %v252
  %v257 = vsel %vm256, 1, 0
  %v258 = vadd.s32 %v248, %v252
  %v259 = vadd.s32 %v251, %v257
  %vm260 = vc.u32 %v258, %v254
  %v261 = vsel %vm260, 1, 0
  %v262 = vadd.s32 %v258, %v254
  %v263 = vadd.s32 %v259, %v261
  %v264 = vadd.s32 %v263, %v253
  %v265 = vadd.s32 %v264, %v255
  %v266 = vmul.u32 %v221, %v212
  %v267 = vadd.s32 %v243, %v262
  %vm268 = vc.u32 %v243, %v262
  %v269 = vadd.s32 %v265, 1
  %v270 = vsel %vm268, %v269, %v265
  %v271 = vadd.s32 %v266, %v270
  %v272 = vadd.s32 %v271, 536870912
  %v273 = vshrl.u32 %v272, 30
  %v274 = vshll.u32 %v273, 30
  %v275 = vsub.s32 %v271, %v274
  %vm276 = vcmp.lt.s32.totalorder %v275, 0
  %v277 = vsub.s32 0, %v275
  %v278 = vsel %vm276, %v277, %v275
  %v279 = vclz %v278
  %v280 = vsub.s32 %v279, 2
  %vm281 = vcmp.gt.s32.totalorder 0, %v280
  %v282 = vsel %vm281, 0, %v280
  %v283 = vsub.s32 32, %v282
  %v284 = vshll.u32 %v275, %v282
  %v285 = vshrl.u32 %v267, %v283
  %v286 = vor.u32 %v284, %v285
  %v287 = vsub.s32 4294967266, %v282
  %v288 = vadd.s32 %v287, 127
  %v289 = vshll.u32 %v288, 23
  %v290 = vor.u32 4788187, %v289
  %v291 = vand.u32 2147483647, %v290
  %v293 = vcvt.s32.f32 %v286
  %v294 = vmul.f32 %v293, %v291
  %v295 = vxor.u32 %v294, 2147483648
  %v296 = vsel %vm175, %v295, %v294
  %v297 = vsub.s32 4, %v273
  %v298 = vsel %vm175, %v297, %v273
  %v299 = vsel %vm174, %v17, %v296
  %v300 = vsel %vm174, 0, %v298
  %v301 = vmul.f32 %v299, %v299
  %v302 = vmul.f32 %v301, -0.001358992
  %v303 = vadd.f32 %v302, 0.041655596
  %v304 = vmul.f32 %v301, %v303
  %v305 = vadd.f32 %v304, -0.4999988
  %v306 = vmul.f32 %v301, %v305
  %v307 = vadd.f32 1.0, %v306
  %v308 = vmul.f32 %v299, %v299
  %v309 = vmul.f32 %v308, -0.00019511016
  %v310 = vadd.f32 %v309, 0.008332121
  %v311 = vmul.f32 %v308, %v310
  %v312 = vadd.f32 %v311, -0.16666654
  %v313 = vmul.f32 %v308, %v312
  %v314 = vadd.f32 %v313, 1.0
  %v315 = vmul.f32 %v314, %v299
  %vm316 = vweird.f32 %v17
  %v317 = vadd.s32 %v300, 3
  %v318 = vand.u32 %v317, 3
  %vm319 = vcmp.lt.s32.totalorder %v318, 2
  %vm320 = vcmp.eq.s32.totalorder %v318, 0
  %v321 = vxor.u32 %v315, 2147483648
  %v322 = vsel %vm320, %v307, %v321
  %vm323 = vcmp.eq.s32.totalorder %v318, 2
  %v324 = vxor.u32 %v307, 2147483648
  %v325 = vsel %vm323, %v324, %v315
  %v326 = vsel %vm319, %v322, %v325
  %v327 = vsel %vm316, nan, %v326
  %v328 = vmul.f32 %v172, %v172
  %v329 = vmul.f32 %v327, %v327
  %v330 = vsub.f32 %v328, %v12
  %v331 = vsub.f32 %v329, %v13
  %332 = vst [vmem:[%s2] sm:$0xff] %v330
  %333 = vst [vmem:[%s2 + $0x8] sm:$0xff] %v331
  // Predicated region
  $region10: #{neural_ode_forward.1} parent=0 // pred_check
    _
  $region11: #{neural_ode_forward.1} parent=0 // pred_check_branch
    %335 = sbr.rel (0) target = $region13
  $region12: #{neural_ode_forward.1} parent=0 // pred_region
    _
  $region13: #{neural_ode_forward.1} parent=0 // pred_fallthru
    _
  // Predicated region
  $region14: #{neural_ode_forward.1} parent=0 // pred_check
    _
  $region15: #{neural_ode_forward.1} parent=0 // pred_check_branch
    %337 = sbr.rel (0) target = $region17
  $region16: #{neural_ode_forward.1} parent=0 // pred_region
    _
  $region17: #{neural_ode_forward.1} parent=0 // pred_fallthru
    _

</llo_original>
